<compile_context>
chip_gen: v6e
topology: v6e:2x2x1
jax: 0.10.0
libtpu: 0.0.40
codegen_flags: <defaults>
</compile_context>

<pallas_src>
import math

import jax
import jax.numpy as jnp
from jax import lax
from jax.experimental import pallas as pl
from jax.experimental.pallas import tpu as pltpu

F32 = jnp.float32
BF16 = jnp.bfloat16
VMEM_SPEC = pl.BlockSpec(memory_space=pltpu.MemorySpace.VMEM)

# Scoped VMEM per call.  48 MiB fits all generations (v7x physical is 64 MiB).
# On v5e/v6e (128 MiB VMEM) both limits below can be raised (~96 MiB) so Y
# stays resident in the aggregate even at full WSI node counts.
_VMEM_LIMIT = 48 * 1024 * 1024
_Y_RESIDENT_BUDGET = 24 * 1024 * 1024   # keep Y resident in the aggregate if this fits

# Tile preferences.  256 fills the 256x256 MXU rows on v6e/v7x; on v7x raise
# _TM_PREF to 512-1024 and _TK_PREF to 1024-2048 when Y cannot stay resident.
_TM_PREF = 256
_TK_PREF = 512


def _pick_tile(n, pref, align):
    """Largest divisor of n that is a multiple of `align` and <= pref.
    Falls back to n (full dim), which is always a legal block size."""
    best = None
    for t in range(align, min(pref, n) + 1, align):
        if n % t == 0:
            best = t
    return best if best is not None else n


# ----------------------------- Pallas kernels ------------------------------ #

def _dinv_kernel(a_ref, o_ref):
    """D^{-1/2} per row of the (symmetric) adjacency (initial graph only)."""
    deg = jnp.sum(a_ref[...].astype(F32), axis=1, keepdims=True)        # (tm, 1)
    o_ref[...] = jnp.where(deg > 0, lax.rsqrt(jnp.maximum(deg, 1e-12)), 0.0)


def _xw_kernel(x_ref, dinv_ref, w_ref, y_ref):
    """Y = (dinv * X) @ W  (row-scale before the matmul; bf16 MXU, f32 acc)."""
    xs = (x_ref[...].astype(F32) * dinv_ref[...]).astype(BF16)
    y_ref[...] = jnp.dot(xs, w_ref[...],
                         preferred_element_type=F32).astype(BF16)


def _gcn_aggregate_kernel(a_ref, y_ref, dinv_ref, b_ref, o_ref, stats_ref):
    """Tiled H = dinv * (A @ Y) + b accumulated directly into o_ref across the
    K (reduction) grid axis; A symmetric => row/col degrees identical.  At the
    last K step also emits the per-row-block BatchNorm partial statistics
    (column sum and sum-of-squares) so BN never re-reads H from HBM."""
    k = pl.program_id(1)

    @pl.when(k == 0)
    def _():
        o_ref[...] = jnp.zeros_like(o_ref)

    o_ref[...] += jnp.dot(a_ref[...], y_ref[...], preferred_element_type=F32)

    @pl.when(k == pl.num_programs(1) - 1)
    def _():
        h = dinv_ref[...] * o_ref[...] + b_ref[...]
        o_ref[...] = h
        row_sum = jnp.sum(h, axis=0, keepdims=True)           # (1, F)
        row_sq = jnp.sum(h * h, axis=0, keepdims=True)         # (1, F)
        stats_ref[...] = jnp.concatenate([row_sum, row_sq], axis=0)[None]  # (1,2,F)


def _bn_relu_wx_kernel(h_ref, sc_ref, sh_ref, wst_ref, x_ref, wx_ref):
    """Row-tiled BatchNorm (folded scale/shift) + ReLU + SAG score projections.
    Outputs x (bf16, reused by the next stage's matmul) and lane-dense
    wx = [x@W_rel ; x@W_root] of shape (2, tm) (NT dot, no transpose)."""
    hb = jnp.maximum(h_ref[...] * sc_ref[...] + sh_ref[...], 0.0)
    x_ref[...] = hb.astype(BF16)
    wx_ref[...] = lax.dot_general(wst_ref[...], hb.astype(BF16),
                                  dimension_numbers=(((1,), (1,)), ((), ())),
                                  preferred_element_type=F32)            # (2, tm)


def _score_matvec_kernel(rel_ref, a_ref, root_ref, brel_ref, s_ref):
    """score = tanh(A @ rel + root + b_rel) as a tiled (cols, K) matvec with
    lane-dense (1, tn) output blocks (A symmetric => rel_row @ A == (A rel)^T)."""
    k = pl.program_id(1)

    @pl.when(k == 0)
    def _():
        s_ref[...] = jnp.zeros_like(s_ref)

    s_ref[...] += jnp.dot(rel_ref[...], a_ref[...], preferred_element_type=F32)

    @pl.when(k == pl.num_programs(1) - 1)
    def _():
        s_ref[...] = jnp.tanh(s_ref[...] + root_ref[...] + brel_ref[...])


def _readout_kernel(x_ref, o_ref):
    """global_mean_pool + global_max_pool over equal-size graphs, summed
    (reference does x1 + x2, not concat)."""
    x = x_ref[...]
    o_ref[...] = jnp.mean(x, axis=1) + jnp.max(x, axis=1)


# ------------------------------ kernel wrappers ----------------------------- #

def degree_inv_sqrt(adj):
    n = adj.shape[0]
    tm = _pick_tile(n, 512, 16)                     # bf16 A => sublane align 16
    return pl.pallas_call(
        _dinv_kernel,
        out_shape=jax.ShapeDtypeStruct((n, 1), F32),
        grid=(n // tm,),
        in_specs=[pl.BlockSpec((tm, n), lambda i: (i, 0))],
        out_specs=pl.BlockSpec((tm, 1), lambda i: (i, 0)),
        compiler_params=pltpu.CompilerParams(
            dimension_semantics=("parallel",),
            vmem_limit_bytes=_VMEM_LIMIT),
    )(adj)


def xw_scale(x, dinv, w):
    n, fin = x.shape
    fout = w.shape[1]
    tm = _pick_tile(n, _TM_PREF, 16)
    return pl.pallas_call(
        _xw_kernel,
        out_shape=jax.ShapeDtypeStruct((n, fout), BF16),
        grid=(n // tm,),
        in_specs=[pl.BlockSpec((tm, fin), lambda i: (i, 0)),
                  pl.BlockSpec((tm, 1), lambda i: (i, 0)),
                  pl.BlockSpec((fin, fout), lambda i: (0, 0))],
        out_specs=pl.BlockSpec((tm, fout), lambda i: (i, 0)),
        compiler_params=pltpu.CompilerParams(
            dimension_semantics=("parallel",),
            vmem_limit_bytes=_VMEM_LIMIT),
        cost_estimate=pl.CostEstimate(
            flops=2 * n * fin * fout, transcendentals=0,
            bytes_accessed=n * fin * x.dtype.itemsize + fin * fout * 2 + n * fout * 2),
    )(x, dinv, w)


def gcn_aggregate(adj, y, dinv, b):
    """H = dinv * (A @ Y) + b plus per-row-block BN partial stats."""
    n, fout = y.shape
    tm = _pick_tile(n, _TM_PREF, 16)
    # Keep Y fully resident when it fits (v5e/v6e path); otherwise tile the
    # reduction axis (v7x path: raise _TM_PREF/_TK_PREF, budget for 64 MiB).
    resident_bytes = 2 * (tm * n * 2) + 2 * (n * fout * 2) + 2 * (tm * fout * 4)
    tk = n if resident_bytes <= _Y_RESIDENT_BUDGET else _pick_tile(n, _TK_PREF, 128)
    nb = n // tm
    y_passes = 1 if tk == n else nb
    return pl.pallas_call(
        _gcn_aggregate_kernel,
        out_shape=(jax.ShapeDtypeStruct((n, fout), F32),
                   jax.ShapeDtypeStruct((nb, 2, fout), F32)),
        grid=(nb, n // tk),
        in_specs=[
            pl.BlockSpec((tm, tk), lambda i, k: (i, k)),       # A tile (bf16)
            pl.BlockSpec((tk, fout), lambda i, k: (k, 0)),     # Y (resident if tk==n)
            pl.BlockSpec((tm, 1), lambda i, k: (i, 0)),        # dinv rows
            pl.BlockSpec((1, fout), lambda i, k: (0, 0)),      # bias
        ],
        out_specs=(pl.BlockSpec((tm, fout), lambda i, k: (i, 0)),
                   pl.BlockSpec((1, 2, fout), lambda i, k: (i, 0, 0))),
        compiler_params=pltpu.CompilerParams(
            dimension_semantics=("parallel", "arbitrary"),
            vmem_limit_bytes=_VMEM_LIMIT),
        cost_estimate=pl.CostEstimate(
            flops=2 * n * n * fout, transcendentals=0,
            bytes_accessed=n * n * 2 + y_passes * n * fout * 2 + n * fout * 4),
    )(adj, y, dinv, b)


def gcn_conv(adj, x, dinv, w, b):
    """GCNConv (normalize=True, add_self_loops=False): D^-1/2 A D^-1/2 (XW) + b.
    Returns (H f32, BN partial stats)."""
    y = xw_scale(x, dinv, w)
    return gcn_aggregate(adj, y, dinv, b)


def bn_relu_wx(h, scale, shift, w_score_t):
    n, f = h.shape
    tm = _pick_tile(n, _TM_PREF, 128)   # tm is also the lane dim of the (2, tm) output
    return pl.pallas_call(
        _bn_relu_wx_kernel,
        out_shape=(jax.ShapeDtypeStruct((n, f), BF16),
                   jax.ShapeDtypeStruct((2, n), F32)),
        grid=(n // tm,),
        in_specs=[pl.BlockSpec((tm, f), lambda i: (i, 0)),
                  pl.BlockSpec((1, f), lambda i: (0, 0)),
                  pl.BlockSpec((1, f), lambda i: (0, 0)),
                  pl.BlockSpec((2, f), lambda i: (0, 0))],
        out_specs=(pl.BlockSpec((tm, f), lambda i: (i, 0)),
                   pl.BlockSpec((2, tm), lambda i: (0, i))),
        compiler_params=pltpu.CompilerParams(
            dimension_semantics=("parallel",),
            vmem_limit_bytes=_VMEM_LIMIT),
        cost_estimate=pl.CostEstimate(
            flops=4 * n * f + 4 * n * f, transcendentals=0,
            bytes_accessed=n * f * 4 + n * f * 2 + 2 * n * 4),
    )(h, scale, shift, w_score_t)


def sag_score(adj, rel_row, root_row, b_rel):
    n = adj.shape[0]
    tn = _pick_tile(n, _TM_PREF, 128)
    tk = _pick_tile(n, _TK_PREF, 128)
    return pl.pallas_call(
        _score_matvec_kernel,
        out_shape=jax.ShapeDtypeStruct((1, n), F32),
        grid=(n // tn, n // tk),
        in_specs=[pl.BlockSpec((1, tk), lambda j, k: (0, k)),     # rel (bf16)
                  pl.BlockSpec((tk, tn), lambda j, k: (k, j)),    # A tile (bf16)
                  pl.BlockSpec((1, tn), lambda j, k: (0, j)),     # root term
                  pl.BlockSpec((1, 1), lambda j, k: (0, 0))],     # b_rel
        out_specs=pl.BlockSpec((1, tn), lambda j, k: (0, j)),
        compiler_params=pltpu.CompilerParams(
            dimension_semantics=("parallel", "arbitrary"),
            vmem_limit_bytes=_VMEM_LIMIT),
        cost_estimate=pl.CostEstimate(
            flops=2 * n * n, transcendentals=n,
            bytes_accessed=n * n * 2 + 3 * n * 4),
    )(rel_row, adj, root_row, b_rel)


def readout(x_bkf):
    b, _, f = x_bkf.shape
    return pl.pallas_call(
        _readout_kernel,
        out_shape=jax.ShapeDtypeStruct((b, f), F32),
        in_specs=[VMEM_SPEC],
        out_specs=VMEM_SPEC,
        compiler_params=pltpu.CompilerParams(vmem_limit_bytes=_VMEM_LIMIT),
    )(x_bkf)


# ------------------------------- JAX glue ----------------------------------- #

def topk_pool(x, adj, score, ratio, batch_size, n_per_graph):
    """SAGPooling node selection + edge filtering (data-dependent gather ->
    plain JAX).  Note: argsort tie-breaking may differ from torch.topk on ties.
    `score` is already tanh'd; matches x[perm] * score[perm] in torch_geometric.
    Also returns D^{-1/2} of the pooled adjacency (fused with the gather so no
    extra full-A Pallas sweep is needed for pooled stages)."""
    k = int(math.ceil(ratio * n_per_graph))
    s = score.reshape(batch_size, n_per_graph)
    idx_local = jnp.argsort(-s, axis=1)[:, :k]                        # descending per graph
    perm = (idx_local + jnp.arange(batch_size)[:, None] * n_per_graph).reshape(-1)
    x_new = (x[perm].astype(F32) * score[perm][:, None]).astype(BF16)
    adj_new = adj[perm[:, None], perm[None, :]]                       # single 2-D gather
    deg = jnp.sum(adj_new.astype(F32), axis=1, keepdims=True)         # fused with gather
    dinv_new = jnp.where(deg > 0, lax.rsqrt(jnp.maximum(deg, 1e-12)), 0.0)
    return x_new, adj_new, dinv_new, k


def _bn_fold(stats, n, gamma, beta):
    """Fold batch statistics (from the aggregate finalize) + BN affine params
    into a per-feature scale/shift (BatchNorm with track_running_stats=False)."""
    sums = jnp.sum(stats[:, 0, :], axis=0)
    sqs = jnp.sum(stats[:, 1, :], axis=0)
    mean = sums / n
    var = jnp.maximum(sqs / n - mean * mean, 0.0)                     # biased, as torch BN
    inv_std = lax.rsqrt(var + 1e-5)
    scale = gamma * inv_std[None, :]
    shift = beta - mean[None, :] * scale
    return scale, shift


def init_params(key, in_chan=384):
    def glorot(k, shape):
        lim = math.sqrt(6.0 / (shape[0] + shape[1]))
        return jax.random.uniform(k, shape, F32, -lim, lim)

    keys = iter(jax.random.split(key, 32))
    p = {}
    # GCNConv layers: 384->512->512->256->192 (weights fed to the MXU in bf16)
    for name, (fi, fo) in zip(("1", "2", "3", "4"),
                              ((in_chan, 512), (512, 512), (512, 256), (256, 192))):
        p["w" + name] = glorot(next(keys), (fi, fo)).astype(BF16)
        p["b" + name] = jnp.zeros((1, fo), F32)
    # BatchNorm affine params (PyTorch init: gamma=1, beta=0); f32 elementwise path.
    for name, f in zip(("1", "2", "3"), (512, 512, 256)):
        p["g" + name] = jnp.ones((1, f), F32)
        p["be" + name] = jnp.zeros((1, f), F32)
    # SAGPooling score GNNs GraphConv(F, 1): packed transposed as (2, F):
    #   row 0 = W_rel^T (with bias b_rel), row 1 = W_root^T (no bias).
    for name, f in zip(("p1", "p2", "p3"), (512, 512, 256)):
        w_rel = glorot(next(keys), (f, 1))
        w_root = glorot(next(keys), (f, 1))
        p[name + "_wt"] = jnp.concatenate([w_rel, w_root], axis=1).T.astype(BF16)
        p[name + "_brel"] = jnp.zeros((1, 1), F32)
    return p


def gcn_block_forward(x, adj, params, batch_size, n_per_graph):
    """Forward of GCN_block (create_tensor_with_specified_number yields
    equal-size contiguous graphs, so segments stay equal-sized after pooling).
    BatchNorm uses batch statistics (track_running_stats=False semantics)."""
    p = params
    dinv = degree_inv_sqrt(adj)                                       # only full-A degree sweep
    for conv, pool, ratio in (("1", "p1", 0.6), ("2", "p2", 0.6), ("3", "p3", 0.5)):
        h, stats = gcn_conv(adj, x, dinv, p["w" + conv], p["b" + conv])
        scale, shift = _bn_fold(stats, h.shape[0], p["g" + conv], p["be" + conv])
        x, wx = bn_relu_wx(h, scale, shift, p[pool + "_wt"])          # x bf16, wx (2, N)
        rel_row = wx[0:1].astype(BF16)
        root_row = wx[1:2]
        score = sag_score(adj, rel_row, root_row, p[pool + "_brel"])  # (1, N), tanh'd
        x, adj, dinv, n_per_graph = topk_pool(x, adj, score.reshape(-1), ratio,
                                              batch_size, n_per_graph)

    h, _ = gcn_conv(adj, x, dinv, p["w4"], p["b4"])                   # (N3, 192)
    out = readout(h.reshape(batch_size, n_per_graph, h.shape[-1]))    # mean + max pool
    return out                                                        # (B, 192)


def gcn_forward(node_feats, adj, params, batch_size, n_per_graph):
    # TODO(synk): ViT-256 feature extractor, relation-matrix construction, ViT-4K and
    # vitswsi heads are undefined in the reference; only the GCN_block path runs.
    feats_gcn4k = gcn_block_forward(node_feats, adj, params, batch_size, n_per_graph)
    return feats_gcn4k[:, None, :]                                    # unsqueeze(dim=1)


# --------------------------------- main ------------------------------------- #

if __name__ == "__main__":
    key = jax.random.PRNGKey(0)
    k_feat, k_adj, k_par = jax.random.split(key, 3)

    batch_size = 2          # number of graphs (whole-slide images)
    n_per_graph = 256       # patches (nodes) per image (small but exercises tiling)
    in_chan = 384           # ViT-256 CLS feature dim (fixed by the module)
    n_nodes = batch_size * n_per_graph

    # Synthetic ViT-256 patch features (stand-in for features_cls256).
    node_feats = jax.random.normal(k_feat, (n_nodes, in_chan), F32)

    # Deterministic block-diagonal symmetric adjacency (stand-in for the relation
    # matrix), stored in bf16 (halves the dominant HBM traffic; 0/1 exact in bf16).
    a = (jax.random.uniform(k_adj, (batch_size, n_per_graph, n_per_graph)) < 0.1)
    a = jnp.logical_or(a, jnp.transpose(a, (0, 2, 1)))
    a = jnp.logical_and(a, ~jnp.eye(n_per_graph, dtype=bool)[None])   # no self loops
    adj = jnp.zeros((n_nodes, n_nodes), F32)
    for g in range(batch_size):
        s = g * n_per_graph
        adj = adj.at[s:s + n_per_graph, s:s + n_per_graph].set(a[g].astype(F32))
    adj = adj.astype(BF16)

    params = init_params(k_par, in_chan=in_chan)

    out = gcn_forward(node_feats, adj, params, batch_size, n_per_graph)
    out = jax.block_until_ready(out)
    assert out.shape == (batch_size, 1, 192) and jnp.isfinite(out).all()
    print("KERNEL_OK")
</pallas_src>

<mosaic_0001>
module attributes {stable_mosaic.version = 11 : i64} {
  func.func @_dinv_kernel(%arg0: i32, %arg1: memref<512x512xbf16, #tpu.memory_space<vmem>>, %arg2: memref<512x1xf32, #tpu.memory_space<vmem>>) attributes {dimension_semantics = [#tpu.dimension_semantics<parallel>], iteration_bounds = array<i64: 1>, scalar_prefetch = 0 : i64, scratch_operands = 0 : i64, tpu.core_type = #tpu.core_type<tc>, window_params = [{transform_indices = @transform_0, window_bounds = array<i64: 512, 512>}, {transform_indices = @transform_1, window_bounds = array<i64: 512, 1>}]} {
    %c0 = arith.constant 0 : index
    %c0_0 = arith.constant 0 : index
    %0 = vector.load %arg1[%c0, %c0_0] : memref<512x512xbf16, #tpu.memory_space<vmem>>, vector<512x512xbf16>
    %1 = arith.extf %0 : vector<512x512xbf16> to vector<512x512xf32>
    %cst = arith.constant dense<0.000000e+00> : vector<512xf32>
    %2 = vector.multi_reduction <add>, %1, %cst [1] : vector<512x512xf32> to vector<512xf32>
    %3 = vector.shape_cast %2 : vector<512xf32> to vector<512x1xf32>
    %cst_1 = arith.constant 0.000000e+00 : f32
    %4 = vector.broadcast %cst_1 : f32 to vector<512x1xf32>
    %5 = arith.cmpf ogt, %3, %4 : vector<512x1xf32>
    %cst_2 = arith.constant 9.99999996E-13 : f32
    %6 = vector.broadcast %cst_2 : f32 to vector<512x1xf32>
    %7 = arith.maximumf %3, %6 : vector<512x1xf32>
    %8 = math.rsqrt %7 : vector<512x1xf32>
    %cst_3 = arith.constant 0.000000e+00 : f32
    %9 = vector.broadcast %cst_3 : f32 to vector<512x1xf32>
    %10 = arith.select %5, %8, %9 : vector<512x1xi1>, vector<512x1xf32>
    %c0_4 = arith.constant 0 : index
    %c0_5 = arith.constant 0 : index
    %11 = vector.load %arg2[%c0_4, %c0_5] : memref<512x1xf32, #tpu.memory_space<vmem>>, vector<512x1xf32>
    tpu.vector_store %arg2[%c0_4, %c0_5], %10 {strides = array<i32>} : memref<512x1xf32, #tpu.memory_space<vmem>>, vector<512x1xf32>,
    return
  }
  func.func @transform_0(%arg0: i32) -> (i32, i32) {
    %c0_i32 = arith.constant 0 : i32
    %c0_i32_0 = arith.constant 0 : i32
    return %arg0, %c0_i32 : i32, i32
  }
  func.func @transform_1(%arg0: i32) -> (i32, i32) {
    %c0_i32 = arith.constant 0 : i32
    %c0_i32_0 = arith.constant 0 : i32
    return %arg0, %c0_i32 : i32, i32
  }
}

</mosaic_0001>

<llo_original>
// kernel: tpu_custom_call.1
$region0: #{tpu_custom_call.1}
  #allocation0 [shape = 'u32[]', space=smem, size = 0x4, offset = 0x4, fixed_abs, tag = 'smem constant byte address 0x4 - core index']
  #allocation1 [shape = 'u32[144,128]{1,0:T(1,128)}', space=vmem, size = 0x12000, scoped, tag = 'internal scratch']
  %s0 = inlined_call_operand.hbm [shape: bf16[512,512], index: 0, kind: input, shape index: {}]
  %s1 = inlined_call_operand.vmem [shape: f32[512,1], index: 1, kind: output, shape index: {}]
  %s2 = sld [smem:[#allocation0]]
  $region18: #{tpu_custom_call.1} parent=0
    _
  %s4 = ssub.s32 1, %s2
  %s5 = scalar_select 0, %s4, %s2
  $region1: #{tpu_custom_call.1} parent=0
    #allocation2 [shape = 'u8[524288]{0}', space=vmem, size = 0x80000, scoped, tag = 'input window, operand 0, single buffered']
    #allocation3 [shape = 's32[1]{0}', space=sflag, size = 0x4, scoped, tag = 'scoped memory for tpu_custom_call.1']
    %6 = vsyncpa [#allocation3], 0
    // Predicated region
    $region2: #{tpu_custom_call.1} parent=1 // pred_check
      _
    $region3: #{tpu_custom_call.1} parent=1 // pred_check_branch
      %8 = sbr.rel (0) target = $region5
    $region4: #{tpu_custom_call.1} parent=1 // pred_region
      %s10 = ssub.s32 16384, 16384
      %11 = vsyncadd [#allocation3], %s10
      %s12 = sshll.u32 [#allocation2], 4
      %s13 = int_to_ptr.vmem [resolvable:$true] %s12
      %18 = dma.hbm_to_vmem [thread:$0]  %s0, 16384, %s13, [#allocation3], 256, 256, 16
    $region5: #{tpu_custom_call.1} parent=1 // pred_fallthru
      _
    // Predicated region
    $region6: #{tpu_custom_call.1} parent=1 // pred_check
      _
    $region7: #{tpu_custom_call.1} parent=1 // pred_check_branch
      %20 = sbr.rel (0) target = $region9
    $region8: #{tpu_custom_call.1} parent=1 // pred_region
      %21 = dma.done [#allocation3], 16384
    $region9: #{tpu_custom_call.1} parent=1 // pred_fallthru
      _
    %v22 = vld [vmem:[#allocation2] sm:$0xff]
    %v23 = vld [vmem:[#allocation2 + $0x8] sm:$0xff]
    %v24 = vld [vmem:[#allocation2 + $0x10] sm:$0xff]
    %v25 = vld [vmem:[#allocation2 + $0x18] sm:$0xff]
    %v26 = vld [vmem:[#allocation2 + $0x20] sm:$0xff]
    %v27 = vld [vmem:[#allocation2 + $0x28] sm:$0xff]
    %v28 = vld [vmem:[#allocation2 + $0x30] sm:$0xff]
    %v29 = vld [vmem:[#allocation2 + $0x38] sm:$0xff]
    %v30 = vld [vmem:[#allocation2 + $0x40] sm:$0xff]
    %v31 = vld [vmem:[#allocation2 + $0x48] sm:$0xff]
    %v32 = vld [vmem:[#allocation2 + $0x50] sm:$0xff]
    %v33 = vld [vmem:[#allocation2 + $0x58] sm:$0xff]
    %v34 = vld [vmem:[#allocation2 + $0x60] sm:$0xff]
    %v35 = vld [vmem:[#allocation2 + $0x68] sm:$0xff]
    %v36 = vld [vmem:[#allocation2 + $0x70] sm:$0xff]
    %v37 = vld [vmem:[#allocation2 + $0x78] sm:$0xff]
    %v38 = vld [vmem:[#allocation2 + $0x80] sm:$0xff]
    %v39 = vld [vmem:[#allocation2 + $0x88] sm:$0xff]
    %v40 = vld [vmem:[#allocation2 + $0x90] sm:$0xff]
    %v41 = vld [vmem:[#allocation2 + $0x98] sm:$0xff]
    %v42 = vld [vmem:[#allocation2 + $0xa0] sm:$0xff]
    %v43 = vld [vmem:[#allocation2 + $0xa8] sm:$0xff]
    %v44 = vld [vmem:[#allocation2 + $0xb0] sm:$0xff]
    %v45 = vld [vmem:[#allocation2 + $0xb8] sm:$0xff]
    %v46 = vld [vmem:[#allocation2 + $0xc0] sm:$0xff]
    %v47 = vld [vmem:[#allocation2 + $0xc8] sm:$0xff]
    %v48 = vld [vmem:[#allocation2 + $0xd0] sm:$0xff]
    %v49 = vld [vmem:[#allocation2 + $0xd8] sm:$0xff]
    %v50 = vld [vmem:[#allocation2 + $0xe0] sm:$0xff]
    %v51 = vld [vmem:[#allocation2 + $0xe8] sm:$0xff]
    %v52 = vld [vmem:[#allocation2 + $0xf0] sm:$0xff]
    %v53 = vld [vmem:[#allocation2 + $0xf8] sm:$0xff]
    %v54 = vld [vmem:[#allocation2 + $0x100] sm:$0xff]
    %v55 = vld [vmem:[#allocation2 + $0x108] sm:$0xff]
    %v56 = vld [vmem:[#allocation2 + $0x110] sm:$0xff]
    %v57 = vld [vmem:[#allocation2 + $0x118] sm:$0xff]
    %v58 = vld [vmem:[#allocation2 + $0x120] sm:$0xff]
    %v59 = vld [vmem:[#allocation2 + $0x128] sm:$0xff]
    %v60 = vld [vmem:[#allocation2 + $0x130] sm:$0xff]
    %v61 = vld [vmem:[#allocation2 + $0x138] sm:$0xff]
    %v62 = vld [vmem:[#allocation2 + $0x140] sm:$0xff]
    %v63 = vld [vmem:[#allocation2 + $0x148] sm:$0xff]
    %v64 = vld [vmem:[#allocation2 + $0x150] sm:$0xff]
    %v65 = vld [vmem:[#allocation2 + $0x158] sm:$0xff]
    %v66 = vld [vmem:[#allocation2 + $0x160] sm:$0xff]
    %v67 = vld [vmem:[#allocation2 + $0x168] sm:$0xff]
    %v68 = vld [vmem:[#allocation2 + $0x170] sm:$0xff]
    %v69 = vld [vmem:[#allocation2 + $0x178] sm:$0xff]
    %v70 = vld [vmem:[#allocation2 + $0x180] sm:$0xff]
    %v71 = vld [vmem:[#allocation2 + $0x188] sm:$0xff]
    %v72 = vld [vmem:[#allocation2 + $0x190] sm:$0xff]
    %v73 = vld [vmem:[#allocation2 + $0x198] sm:$0xff]
    %v74 = vld [vmem:[#allocation2 + $0x1a0] sm:$0xff]
    %v75 = vld [vmem:[#allocation2 + $0x1a8] sm:$0xff]
    %v76 = vld [vmem:[#allocation2 + $0x1b0] sm:$0xff]
    %v77 = vld [vmem:[#allocation2 + $0x1b8] sm:$0xff]
    %v78 = vld [vmem:[#allocation2 + $0x1c0] sm:$0xff]
    %v79 = vld [vmem:[#allocation2 + $0x1c8] sm:$0xff]
    %v80 = vld [vmem:[#allocation2 + $0x1d0] sm:$0xff]
    %v81 = vld [vmem:[#allocation2 + $0x1d8] sm:$0xff]
    %v82 = vld [vmem:[#allocation2 + $0x1e0] sm:$0xff]
    %v83 = vld [vmem:[#allocation2 + $0x1e8] sm:$0xff]
    %v84 = vld [vmem:[#allocation2 + $0x1f0] sm:$0xff]
    %v85 = vld [vmem:[#allocation2 + $0x1f8] sm:$0xff]
    %v86 = vld [vmem:[#allocation2 + $0x200] sm:$0xff]
    %v87 = vld [vmem:[#allocation2 + $0x208] sm:$0xff]
    %v88 = vld [vmem:[#allocation2 + $0x210] sm:$0xff]
    %v89 = vld [vmem:[#allocation2 + $0x218] sm:$0xff]
    %v90 = vld [vmem:[#allocation2 + $0x220] sm:$0xff]
    %v91 = vld [vmem:[#allocation2 + $0x228] sm:$0xff]
    %v92 = vld [vmem:[#allocation2 + $0x230] sm:$0xff]
    %v93 = vld [vmem:[#allocation2 + $0x238] sm:$0xff]
    %v94 = vld [vmem:[#allocation2 + $0x240] sm:$0xff]
    %v95 = vld [vmem:[#allocation2 + $0x248] sm:$0xff]
    %v96 = vld [vmem:[#allocation2 + $0x250] sm:$0xff]
    %v97 = vld [vmem:[#allocation2 + $0x258] sm:$0xff]
    %v98 = vld [vmem:[#allocation2 + $0x260] sm:$0xff]
    %v99 = vld [vmem:[#allocation2 + $0x268] sm:$0xff]
    %v100 = vld [vmem:[#allocation2 + $0x270] sm:$0xff]
    %v101 = vld [vmem:[#allocation2 + $0x278] sm:$0xff]
    %v102 = vld [vmem:[#allocation2 + $0x280] sm:$0xff]
    %v103 = vld [vmem:[#allocation2 + $0x288] sm:$0xff]
    %v104 = vld [vmem:[#allocation2 + $0x290] sm:$0xff]
    %v105 = vld [vmem:[#allocation2 + $0x298] sm:$0xff]
    %v106 = vld [vmem:[#allocation2 + $0x2a0] sm:$0xff]
    %v107 = vld [vmem:[#allocation2 + $0x2a8] sm:$0xff]
    %v108 = vld [vmem:[#allocation2 + $0x2b0] sm:$0xff]
    %v109 = vld [vmem:[#allocation2 + $0x2b8] sm:$0xff]
    %v110 = vld [vmem:[#allocation2 + $0x2c0] sm:$0xff]
    %v111 = vld [vmem:[#allocation2 + $0x2c8] sm:$0xff]
    %v112 = vld [vmem:[#allocation2 + $0x2d0] sm:$0xff]
    %v113 = vld [vmem:[#allocation2 + $0x2d8] sm:$0xff]
    %v114 = vld [vmem:[#allocation2 + $0x2e0] sm:$0xff]
    %v115 = vld [vmem:[#allocation2 + $0x2e8] sm:$0xff]
    %v116 = vld [vmem:[#allocation2 + $0x2f0] sm:$0xff]
    %v117 = vld [vmem:[#allocation2 + $0x2f8] sm:$0xff]
    %v118 = vld [vmem:[#allocation2 + $0x300] sm:$0xff]
    %v119 = vld [vmem:[#allocation2 + $0x308] sm:$0xff]
    %v120 = vld [vmem:[#allocation2 + $0x310] sm:$0xff]
    %v121 = vld [vmem:[#allocation2 + $0x318] sm:$0xff]
    %v122 = vld [vmem:[#allocation2 + $0x320] sm:$0xff]
    %v123 = vld [vmem:[#allocation2 + $0x328] sm:$0xff]
    %v124 = vld [vmem:[#allocation2 + $0x330] sm:$0xff]
    %v125 = vld [vmem:[#allocation2 + $0x338] sm:$0xff]
    %v126 = vld [vmem:[#allocation2 + $0x340] sm:$0xff]
    %v127 = vld [vmem:[#allocation2 + $0x348] sm:$0xff]
    %v128 = vld [vmem:[#allocation2 + $0x350] sm:$0xff]
    %v129 = vld [vmem:[#allocation2 + $0x358] sm:$0xff]
    %v130 = vld [vmem:[#allocation2 + $0x360] sm:$0xff]
    %v131 = vld [vmem:[#allocation2 + $0x368] sm:$0xff]
    %v132 = vld [vmem:[#allocation2 + $0x370] sm:$0xff]
    %v133 = vld [vmem:[#allocation2 + $0x378] sm:$0xff]
    %v134 = vld [vmem:[#allocation2 + $0x380] sm:$0xff]
    %v135 = vld [vmem:[#allocation2 + $0x388] sm:$0xff]
    %v136 = vld [vmem:[#allocation2 + $0x390] sm:$0xff]
    %v137 = vld [vmem:[#allocation2 + $0x398] sm:$0xff]
    %v138 = vld [vmem:[#allocation2 + $0x3a0] sm:$0xff]
    %v139 = vld [vmem:[#allocation2 + $0x3a8] sm:$0xff]
    %v140 = vld [vmem:[#allocation2 + $0x3b0] sm:$0xff]
    %v141 = vld [vmem:[#allocation2 + $0x3b8] sm:$0xff]
    %v142 = vld [vmem:[#allocation2 + $0x3c0] sm:$0xff]
    %v143 = vld [vmem:[#allocation2 + $0x3c8] sm:$0xff]
    %v144 = vld [vmem:[#allocation2 + $0x3d0] sm:$0xff]
    %v145 = vld [vmem:[#allocation2 + $0x3d8] sm:$0xff]
    %v146 = vld [vmem:[#allocation2 + $0x3e0] sm:$0xff]
    %v147 = vld [vmem:[#allocation2 + $0x3e8] sm:$0xff]
    %v148 = vld [vmem:[#allocation2 + $0x3f0] sm:$0xff]
    %v149 = vld [vmem:[#allocation2 + $0x3f8] sm:$0xff]
    %v150 = vunpack.c.l.bf16 %v22
    %v151 = vunpack.c.h.bf16 %v22
    %v152 = vunpack.c.l.bf16 %v23
    %v153 = vunpack.c.h.bf16 %v23
    %v154 = vunpack.c.l.bf16 %v24
    %v155 = vunpack.c.h.bf16 %v24
    %v156 = vunpack.c.l.bf16 %v25
    %v157 = vunpack.c.h.bf16 %v25
    %v158 = vunpack.c.l.bf16 %v26
    %v159 = vunpack.c.h.bf16 %v26
    %v160 = vunpack.c.l.bf16 %v27
    %v161 = vunpack.c.h.bf16 %v27
    %v162 = vunpack.c.l.bf16 %v28
    %v163 = vunpack.c.h.bf16 %v28
    %v164 = vunpack.c.l.bf16 %v29
    %v165 = vunpack.c.h.bf16 %v29
    %v166 = vunpack.c.l.bf16 %v30
    %v167 = vunpack.c.h.bf16 %v30
    %v168 = vunpack.c.l.bf16 %v31
    %v169 = vunpack.c.h.bf16 %v31
    %v170 = vunpack.c.l.bf16 %v32
    %v171 = vunpack.c.h.bf16 %v32
    %v172 = vunpack.c.l.bf16 %v33
    %v173 = vunpack.c.h.bf16 %v33
    %v174 = vunpack.c.l.bf16 %v34
    %v175 = vunpack.c.h.bf16 %v34
    %v176 = vunpack.c.l.bf16 %v35
    %v177 = vunpack.c.h.bf16 %v35
    %v178 = vunpack.c.l.bf16 %v36
    %v179 = vunpack.c.h.bf16 %v36
    %v180 = vunpack.c.l.bf16 %v37
    %v181 = vunpack.c.h.bf16 %v37
    %v182 = vunpack.c.l.bf16 %v38
    %v183 = vunpack.c.h.bf16 %v38
    %v184 = vunpack.c.l.bf16 %v39
    %v185 = vunpack.c.h.bf16 %v39
    %v186 = vunpack.c.l.bf16 %v40
    %v187 = vunpack.c.h.bf16 %v40
    %v188 = vunpack.c.l.bf16 %v41
    %v189 = vunpack.c.h.bf16 %v41
    %v190 = vunpack.c.l.bf16 %v42
    %v191 = vunpack.c.h.bf16 %v42
    %v192 = vunpack.c.l.bf16 %v43
    %v193 = vunpack.c.h.bf16 %v43
    %v194 = vunpack.c.l.bf16 %v44
    %v195 = vunpack.c.h.bf16 %v44
    %v196 = vunpack.c.l.bf16 %v45
    %v197 = vunpack.c.h.bf16 %v45
    %v198 = vunpack.c.l.bf16 %v46
    %v199 = vunpack.c.h.bf16 %v46
    %v200 = vunpack.c.l.bf16 %v47
    %v201 = vunpack.c.h.bf16 %v47
    %v202 = vunpack.c.l.bf16 %v48
    %v203 = vunpack.c.h.bf16 %v48
    %v204 = vunpack.c.l.bf16 %v49
    %v205 = vunpack.c.h.bf16 %v49
    %v206 = vunpack.c.l.bf16 %v50
    %v207 = vunpack.c.h.bf16 %v50
    %v208 = vunpack.c.l.bf16 %v51
    %v209 = vunpack.c.h.bf16 %v51
    %v210 = vunpack.c.l.bf16 %v52
    %v211 = vunpack.c.h.bf16 %v52
    %v212 = vunpack.c.l.bf16 %v53
    %v213 = vunpack.c.h.bf16 %v53
    %v214 = vunpack.c.l.bf16 %v54
    %v215 = vunpack.c.h.bf16 %v54
    %v216 = vunpack.c.l.bf16 %v55
    %v217 = vunpack.c.h.bf16 %v55
    %v218 = vunpack.c.l.bf16 %v56
    %v219 = vunpack.c.h.bf16 %v56
    %v220 = vunpack.c.l.bf16 %v57
    %v221 = vunpack.c.h.bf16 %v57
    %v222 = vunpack.c.l.bf16 %v58
    %v223 = vunpack.c.h.bf16 %v58
    %v224 = vunpack.c.l.bf16 %v59
    %v225 = vunpack.c.h.bf16 %v59
    %v226 = vunpack.c.l.bf16 %v60
    %v227 = vunpack.c.h.bf16 %v60
    %v228 = vunpack.c.l.bf16 %v61
    %v229 = vunpack.c.h.bf16 %v61
    %v230 = vunpack.c.l.bf16 %v62
    %v231 = vunpack.c.h.bf16 %v62
    %v232 = vunpack.c.l.bf16 %v63
    %v233 = vunpack.c.h.bf16 %v63
    %v234 = vunpack.c.l.bf16 %v64
    %v235 = vunpack.c.h.bf16 %v64
    %v236 = vunpack.c.l.bf16 %v65
    %v237 = vunpack.c.h.bf16 %v65
    %v238 = vunpack.c.l.bf16 %v66
    %v239 = vunpack.c.h.bf16 %v66
    %v240 = vunpack.c.l.bf16 %v67
    %v241 = vunpack.c.h.bf16 %v67
    %v242 = vunpack.c.l.bf16 %v68
    %v243 = vunpack.c.h.bf16 %v68
    %v244 = vunpack.c.l.bf16 %v69
    %v245 = vunpack.c.h.bf16 %v69
    %v246 = vunpack.c.l.bf16 %v70
    %v247 = vunpack.c.h.bf16 %v70
    %v248 = vunpack.c.l.bf16 %v71
    %v249 = vunpack.c.h.bf16 %v71
    %v250 = vunpack.c.l.bf16 %v72
    %v251 = vunpack.c.h.bf16 %v72
    %v252 = vunpack.c.l.bf16 %v73
    %v253 = vunpack.c.h.bf16 %v73
    %v254 = vunpack.c.l.bf16 %v74
    %v255 = vunpack.c.h.bf16 %v74
    %v256 = vunpack.c.l.bf16 %v75
    %v257 = vunpack.c.h.bf16 %v75
    %v258 = vunpack.c.l.bf16 %v76
    %v259 = vunpack.c.h.bf16 %v76
    %v260 = vunpack.c.l.bf16 %v77
    %v261 = vunpack.c.h.bf16 %v77
    %v262 = vunpack.c.l.bf16 %v78
    %v263 = vunpack.c.h.bf16 %v78
    %v264 = vunpack.c.l.bf16 %v79
    %v265 = vunpack.c.h.bf16 %v79
    %v266 = vunpack.c.l.bf16 %v80
    %v267 = vunpack.c.h.bf16 %v80
    %v268 = vunpack.c.l.bf16 %v81
    %v269 = vunpack.c.h.bf16 %v81
    %v270 = vunpack.c.l.bf16 %v82
    %v271 = vunpack.c.h.bf16 %v82
    %v272 = vunpack.c.l.bf16 %v83
    %v273 = vunpack.c.h.bf16 %v83
    %v274 = vunpack.c.l.bf16 %v84
    %v275 = vunpack.c.h.bf16 %v84
    %v276 = vunpack.c.l.bf16 %v85
    %v277 = vunpack.c.h.bf16 %v85
    %v278 = vunpack.c.l.bf16 %v86
    %v279 = vunpack.c.h.bf16 %v86
    %v280 = vunpack.c.l.bf16 %v87
    %v281 = vunpack.c.h.bf16 %v87
    %v282 = vunpack.c.l.bf16 %v88
    %v283 = vunpack.c.h.bf16 %v88
    %v284 = vunpack.c.l.bf16 %v89
    %v285 = vunpack.c.h.bf16 %v89
    %v286 = vunpack.c.l.bf16 %v90
    %v287 = vunpack.c.h.bf16 %v90
    %v288 = vunpack.c.l.bf16 %v91
    %v289 = vunpack.c.h.bf16 %v91
    %v290 = vunpack.c.l.bf16 %v92
    %v291 = vunpack.c.h.bf16 %v92
    %v292 = vunpack.c.l.bf16 %v93
    %v293 = vunpack.c.h.bf16 %v93
    %v294 = vunpack.c.l.bf16 %v94
    %v295 = vunpack.c.h.bf16 %v94
    %v296 = vunpack.c.l.bf16 %v95
    %v297 = vunpack.c.h.bf16 %v95
    %v298 = vunpack.c.l.bf16 %v96
    %v299 = vunpack.c.h.bf16 %v96
    %v300 = vunpack.c.l.bf16 %v97
    %v301 = vunpack.c.h.bf16 %v97
    %v302 = vunpack.c.l.bf16 %v98
    %v303 = vunpack.c.h.bf16 %v98
    %v304 = vunpack.c.l.bf16 %v99
    %v305 = vunpack.c.h.bf16 %v99
    %v306 = vunpack.c.l.bf16 %v100
    %v307 = vunpack.c.h.bf16 %v100
    %v308 = vunpack.c.l.bf16 %v101
    %v309 = vunpack.c.h.bf16 %v101
    %v310 = vunpack.c.l.bf16 %v102
    %v311 = vunpack.c.h.bf16 %v102
    %v312 = vunpack.c.l.bf16 %v103
    %v313 = vunpack.c.h.bf16 %v103
    %v314 = vunpack.c.l.bf16 %v104
    %v315 = vunpack.c.h.bf16 %v104
    %v316 = vunpack.c.l.bf16 %v105
    %v317 = vunpack.c.h.bf16 %v105
    %v318 = vunpack.c.l.bf16 %v106
    %v319 = vunpack.c.h.bf16 %v106
    %v320 = vunpack.c.l.bf16 %v107
    %v321 = vunpack.c.h.bf16 %v107
    %v322 = vunpack.c.l.bf16 %v108
    %v323 = vunpack.c.h.bf16 %v108
    %v324 = vunpack.c.l.bf16 %v109
    %v325 = vunpack.c.h.bf16 %v109
    %v326 = vunpack.c.l.bf16 %v110
    %v327 = vunpack.c.h.bf16 %v110
    %v328 = vunpack.c.l.bf16 %v111
    %v329 = vunpack.c.h.bf16 %v111
    %v330 = vunpack.c.l.bf16 %v112
    %v331 = vunpack.c.h.bf16 %v112
    %v332 = vunpack.c.l.bf16 %v113
    %v333 = vunpack.c.h.bf16 %v113
    %v334 = vunpack.c.l.bf16 %v114
    %v335 = vunpack.c.h.bf16 %v114
    %v336 = vunpack.c.l.bf16 %v115
    %v337 = vunpack.c.h.bf16 %v115
    %v338 = vunpack.c.l.bf16 %v116
    %v339 = vunpack.c.h.bf16 %v116
    %v340 = vunpack.c.l.bf16 %v117
    %v341 = vunpack.c.h.bf16 %v117
    %v342 = vunpack.c.l.bf16 %v118
    %v343 = vunpack.c.h.bf16 %v118
    %v344 = vunpack.c.l.bf16 %v119
    %v345 = vunpack.c.h.bf16 %v119
    %v346 = vunpack.c.l.bf16 %v120
    %v347 = vunpack.c.h.bf16 %v120
    %v348 = vunpack.c.l.bf16 %v121
    %v349 = vunpack.c.h.bf16 %v121
    %v350 = vunpack.c.l.bf16 %v122
    %v351 = vunpack.c.h.bf16 %v122
    %v352 = vunpack.c.l.bf16 %v123
    %v353 = vunpack.c.h.bf16 %v123
    %v354 = vunpack.c.l.bf16 %v124
    %v355 = vunpack.c.h.bf16 %v124
    %v356 = vunpack.c.l.bf16 %v125
    %v357 = vunpack.c.h.bf16 %v125
    %v358 = vunpack.c.l.bf16 %v126
    %v359 = vunpack.c.h.bf16 %v126
    %v360 = vunpack.c.l.bf16 %v127
    %v361 = vunpack.c.h.bf16 %v127
    %v362 = vunpack.c.l.bf16 %v128
    %v363 = vunpack.c.h.bf16 %v128
    %v364 = vunpack.c.l.bf16 %v129
    %v365 = vunpack.c.h.bf16 %v129
    %v366 = vunpack.c.l.bf16 %v130
    %v367 = vunpack.c.h.bf16 %v130
    %v368 = vunpack.c.l.bf16 %v131
    %v369 = vunpack.c.h.bf16 %v131
    %v370 = vunpack.c.l.bf16 %v132
    %v371 = vunpack.c.h.bf16 %v132
    %v372 = vunpack.c.l.bf16 %v133
    %v373 = vunpack.c.h.bf16 %v133
    %v374 = vunpack.c.l.bf16 %v134
    %v375 = vunpack.c.h.bf16 %v134
    %v376 = vunpack.c.l.bf16 %v135
    %v377 = vunpack.c.h.bf16 %v135
    %v378 = vunpack.c.l.bf16 %v136
    %v379 = vunpack.c.h.bf16 %v136
    %v380 = vunpack.c.l.bf16 %v137
    %v381 = vunpack.c.h.bf16 %v137
    %v382 = vunpack.c.l.bf16 %v138
    %v383 = vunpack.c.h.bf16 %v138
    %v384 = vunpack.c.l.bf16 %v139
    %v385 = vunpack.c.h.bf16 %v139
    %v386 = vunpack.c.l.bf16 %v140
    %v387 = vunpack.c.h.bf16 %v140
    %v388 = vunpack.c.l.bf16 %v141
    %v389 = vunpack.c.h.bf16 %v141
    %v390 = vunpack.c.l.bf16 %v142
    %v391 = vunpack.c.h.bf16 %v142
    %v392 = vunpack.c.l.bf16 %v143
    %v393 = vunpack.c.h.bf16 %v143
    %v394 = vunpack.c.l.bf16 %v144
    %v395 = vunpack.c.h.bf16 %v144
    %v396 = vunpack.c.l.bf16 %v145
    %v397 = vunpack.c.h.bf16 %v145
    %v398 = vunpack.c.l.bf16 %v146
    %v399 = vunpack.c.h.bf16 %v146
    %v400 = vunpack.c.l.bf16 %v147
    %v401 = vunpack.c.h.bf16 %v147
    %v402 = vunpack.c.l.bf16 %v148
    %v403 = vunpack.c.h.bf16 %v148
    %v404 = vunpack.c.l.bf16 %v149
    %v405 = vunpack.c.h.bf16 %v149
    %v406 = vadd.f32 %v150, %v151
    %v407 = vadd.f32 %v406, %v152
    %v408 = vadd.f32 %v407, %v153
    %409 = vadd.xlane.f32.xlu0 %v408
    %v410 = vpop.xlane.xlu0 %409
    %v411 = vadd.f32 %v154, %v155
    %v412 = vadd.f32 %v411, %v156
    %v413 = vadd.f32 %v412, %v157
    %414 = vadd.xlane.f32.xlu0 %v413
    %v415 = vpop.xlane.xlu0 %414
    %v416 = vadd.f32 %v158, %v159
    %v417 = vadd.f32 %v416, %v160
    %v418 = vadd.f32 %v417, %v161
    %419 = vadd.xlane.f32.xlu0 %v418
    %v420 = vpop.xlane.xlu0 %419
    %v421 = vadd.f32 %v162, %v163
    %v422 = vadd.f32 %v421, %v164
    %v423 = vadd.f32 %v422, %v165
    %424 = vadd.xlane.f32.xlu0 %v423
    %v425 = vpop.xlane.xlu0 %424
    %v426 = vadd.f32 %v166, %v167
    %v427 = vadd.f32 %v426, %v168
    %v428 = vadd.f32 %v427, %v169
    %429 = vadd.xlane.f32.xlu0 %v428
    %v430 = vpop.xlane.xlu0 %429
    %v431 = vadd.f32 %v170, %v171
    %v432 = vadd.f32 %v431, %v172
    %v433 = vadd.f32 %v432, %v173
    %434 = vadd.xlane.f32.xlu0 %v433
    %v435 = vpop.xlane.xlu0 %434
    %v436 = vadd.f32 %v174, %v175
    %v437 = vadd.f32 %v436, %v176
    %v438 = vadd.f32 %v437, %v177
    %439 = vadd.xlane.f32.xlu0 %v438
    %v440 = vpop.xlane.xlu0 %439
    %v441 = vadd.f32 %v178, %v179
    %v442 = vadd.f32 %v441, %v180
    %v443 = vadd.f32 %v442, %v181
    %444 = vadd.xlane.f32.xlu0 %v443
    %v445 = vpop.xlane.xlu0 %444
    %v446 = vadd.f32 %v182, %v183
    %v447 = vadd.f32 %v446, %v184
    %v448 = vadd.f32 %v447, %v185
    %449 = vadd.xlane.f32.xlu0 %v448
    %v450 = vpop.xlane.xlu0 %449
    %v451 = vadd.f32 %v186, %v187
    %v452 = vadd.f32 %v451, %v188
    %v453 = vadd.f32 %v452, %v189
    %454 = vadd.xlane.f32.xlu0 %v453
    %v455 = vpop.xlane.xlu0 %454
    %v456 = vadd.f32 %v190, %v191
    %v457 = vadd.f32 %v456, %v192
    %v458 = vadd.f32 %v457, %v193
    %459 = vadd.xlane.f32.xlu0 %v458
    %v460 = vpop.xlane.xlu0 %459
    %v461 = vadd.f32 %v194, %v195
    %v462 = vadd.f32 %v461, %v196
    %v463 = vadd.f32 %v462, %v197
    %464 = vadd.xlane.f32.xlu0 %v463
    %v465 = vpop.xlane.xlu0 %464
    %v466 = vadd.f32 %v198, %v199
    %v467 = vadd.f32 %v466, %v200
    %v468 = vadd.f32 %v467, %v201
    %469 = vadd.xlane.f32.xlu0 %v468
    %v470 = vpop.xlane.xlu0 %469
    %v471 = vadd.f32 %v202, %v203
    %v472 = vadd.f32 %v471, %v204
    %v473 = vadd.f32 %v472, %v205
    %474 = vadd.xlane.f32.xlu0 %v473
    %v475 = vpop.xlane.xlu0 %474
    %v476 = vadd.f32 %v206, %v207
    %v477 = vadd.f32 %v476, %v208
    %v478 = vadd.f32 %v477, %v209
    %479 = vadd.xlane.f32.xlu0 %v478
    %v480 = vpop.xlane.xlu0 %479
    %v481 = vadd.f32 %v210, %v211
    %v482 = vadd.f32 %v481, %v212
    %v483 = vadd.f32 %v482, %v213
    %484 = vadd.xlane.f32.xlu0 %v483
    %v485 = vpop.xlane.xlu0 %484
    %v486 = vadd.f32 %v214, %v215
    %v487 = vadd.f32 %v486, %v216
    %v488 = vadd.f32 %v487, %v217
    %489 = vadd.xlane.f32.xlu0 %v488
    %v490 = vpop.xlane.xlu0 %489
    %v491 = vadd.f32 %v218, %v219
    %v492 = vadd.f32 %v491, %v220
    %v493 = vadd.f32 %v492, %v221
    %494 = vadd.xlane.f32.xlu0 %v493
    %v495 = vpop.xlane.xlu0 %494
    %v496 = vadd.f32 %v222, %v223
    %v497 = vadd.f32 %v496, %v224
    %v498 = vadd.f32 %v497, %v225
    %499 = vadd.xlane.f32.xlu0 %v498
    %v500 = vpop.xlane.xlu0 %499
    %v501 = vadd.f32 %v226, %v227
    %v502 = vadd.f32 %v501, %v228
    %v503 = vadd.f32 %v502, %v229
    %504 = vadd.xlane.f32.xlu0 %v503
    %v505 = vpop.xlane.xlu0 %504
    %v506 = vadd.f32 %v230, %v231
    %v507 = vadd.f32 %v506, %v232
    %v508 = vadd.f32 %v507, %v233
    %509 = vadd.xlane.f32.xlu0 %v508
    %v510 = vpop.xlane.xlu0 %509
    %v511 = vadd.f32 %v234, %v235
    %v512 = vadd.f32 %v511, %v236
    %v513 = vadd.f32 %v512, %v237
    %514 = vadd.xlane.f32.xlu0 %v513
    %v515 = vpop.xlane.xlu0 %514
    %v516 = vadd.f32 %v238, %v239
    %v517 = vadd.f32 %v516, %v240
    %v518 = vadd.f32 %v517, %v241
    %519 = vadd.xlane.f32.xlu0 %v518
    %v520 = vpop.xlane.xlu0 %519
    %v521 = vadd.f32 %v242, %v243
    %v522 = vadd.f32 %v521, %v244
    %v523 = vadd.f32 %v522, %v245
    %524 = vadd.xlane.f32.xlu0 %v523
    %v525 = vpop.xlane.xlu0 %524
    %v526 = vadd.f32 %v246, %v247
    %v527 = vadd.f32 %v526, %v248
    %v528 = vadd.f32 %v527, %v249
    %529 = vadd.xlane.f32.xlu0 %v528
    %v530 = vpop.xlane.xlu0 %529
    %v531 = vadd.f32 %v250, %v251
    %v532 = vadd.f32 %v531, %v252
    %v533 = vadd.f32 %v532, %v253
    %534 = vadd.xlane.f32.xlu0 %v533
    %v535 = vpop.xlane.xlu0 %534
    %v536 = vadd.f32 %v254, %v255
    %v537 = vadd.f32 %v536, %v256
    %v538 = vadd.f32 %v537, %v257
    %539 = vadd.xlane.f32.xlu0 %v538
    %v540 = vpop.xlane.xlu0 %539
    %v541 = vadd.f32 %v258, %v259
    %v542 = vadd.f32 %v541, %v260
    %v543 = vadd.f32 %v542, %v261
    %544 = vadd.xlane.f32.xlu0 %v543
    %v545 = vpop.xlane.xlu0 %544
    %v546 = vadd.f32 %v262, %v263
    %v547 = vadd.f32 %v546, %v264
    %v548 = vadd.f32 %v547, %v265
    %549 = vadd.xlane.f32.xlu0 %v548
    %v550 = vpop.xlane.xlu0 %549
    %v551 = vadd.f32 %v266, %v267
    %v552 = vadd.f32 %v551, %v268
    %v553 = vadd.f32 %v552, %v269
    %554 = vadd.xlane.f32.xlu0 %v553
    %v555 = vpop.xlane.xlu0 %554
    %v556 = vadd.f32 %v270, %v271
    %v557 = vadd.f32 %v556, %v272
    %v558 = vadd.f32 %v557, %v273
    %559 = vadd.xlane.f32.xlu0 %v558
    %v560 = vpop.xlane.xlu0 %559
    %v561 = vadd.f32 %v274, %v275
    %v562 = vadd.f32 %v561, %v276
    %v563 = vadd.f32 %v562, %v277
    %564 = vadd.xlane.f32.xlu0 %v563
    %v565 = vpop.xlane.xlu0 %564
    %v566 = vadd.f32 %v278, %v279
    %v567 = vadd.f32 %v566, %v280
    %v568 = vadd.f32 %v567, %v281
    %569 = vadd.xlane.f32.xlu0 %v568
    %v570 = vpop.xlane.xlu0 %569
    %v571 = vadd.f32 %v282, %v283
    %v572 = vadd.f32 %v571, %v284
    %v573 = vadd.f32 %v572, %v285
    %574 = vadd.xlane.f32.xlu0 %v573
    %v575 = vpop.xlane.xlu0 %574
    %v576 = vadd.f32 %v286, %v287
    %v577 = vadd.f32 %v576, %v288
    %v578 = vadd.f32 %v577, %v289
    %579 = vadd.xlane.f32.xlu0 %v578
    %v580 = vpop.xlane.xlu0 %579
    %v581 = vadd.f32 %v290, %v291
    %v582 = vadd.f32 %v581, %v292
    %v583 = vadd.f32 %v582, %v293
    %584 = vadd.xlane.f32.xlu0 %v583
    %v585 = vpop.xlane.xlu0 %584
    %v586 = vadd.f32 %v294, %v295
    %v587 = vadd.f32 %v586, %v296
    %v588 = vadd.f32 %v587, %v297
    %589 = vadd.xlane.f32.xlu0 %v588
    %v590 = vpop.xlane.xlu0 %589
    %v591 = vadd.f32 %v298, %v299
    %v592 = vadd.f32 %v591, %v300
    %v593 = vadd.f32 %v592, %v301
    %594 = vadd.xlane.f32.xlu0 %v593
    %v595 = vpop.xlane.xlu0 %594
    %v596 = vadd.f32 %v302, %v303
    %v597 = vadd.f32 %v596, %v304
    %v598 = vadd.f32 %v597, %v305
    %599 = vadd.xlane.f32.xlu0 %v598
    %v600 = vpop.xlane.xlu0 %599
    %v601 = vadd.f32 %v306, %v307
    %v602 = vadd.f32 %v601, %v308
    %v603 = vadd.f32 %v602, %v309
    %604 = vadd.xlane.f32.xlu0 %v603
    %v605 = vpop.xlane.xlu0 %604
    %v606 = vadd.f32 %v310, %v311
    %v607 = vadd.f32 %v606, %v312
    %v608 = vadd.f32 %v607, %v313
    %609 = vadd.xlane.f32.xlu0 %v608
    %v610 = vpop.xlane.xlu0 %609
    %v611 = vadd.f32 %v314, %v315
    %v612 = vadd.f32 %v611, %v316
    %v613 = vadd.f32 %v612, %v317
    %614 = vadd.xlane.f32.xlu0 %v613
    %v615 = vpop.xlane.xlu0 %614
    %v616 = vadd.f32 %v318, %v319
    %v617 = vadd.f32 %v616, %v320
    %v618 = vadd.f32 %v617, %v321
    %619 = vadd.xlane.f32.xlu0 %v618
    %v620 = vpop.xlane.xlu0 %619
    %v621 = vadd.f32 %v322, %v323
    %v622 = vadd.f32 %v621, %v324
    %v623 = vadd.f32 %v622, %v325
    %624 = vadd.xlane.f32.xlu0 %v623
    %v625 = vpop.xlane.xlu0 %624
    %v626 = vadd.f32 %v326, %v327
    %v627 = vadd.f32 %v626, %v328
    %v628 = vadd.f32 %v627, %v329
    %629 = vadd.xlane.f32.xlu0 %v628
    %v630 = vpop.xlane.xlu0 %629
    %v631 = vadd.f32 %v330, %v331
    %v632 = vadd.f32 %v631, %v332
    %v633 = vadd.f32 %v632, %v333
    %634 = vadd.xlane.f32.xlu0 %v633
    %v635 = vpop.xlane.xlu0 %634
    %v636 = vadd.f32 %v334, %v335
    %v637 = vadd.f32 %v636, %v336
    %v638 = vadd.f32 %v637, %v337
    %639 = vadd.xlane.f32.xlu0 %v638
    %v640 = vpop.xlane.xlu0 %639
    %v641 = vadd.f32 %v338, %v339
    %v642 = vadd.f32 %v641, %v340
    %v643 = vadd.f32 %v642, %v341
    %644 = vadd.xlane.f32.xlu0 %v643
    %v645 = vpop.xlane.xlu0 %644
    %v646 = vadd.f32 %v342, %v343
    %v647 = vadd.f32 %v646, %v344
    %v648 = vadd.f32 %v647, %v345
    %649 = vadd.xlane.f32.xlu0 %v648
    %v650 = vpop.xlane.xlu0 %649
    %v651 = vadd.f32 %v346, %v347
    %v652 = vadd.f32 %v651, %v348
    %v653 = vadd.f32 %v652, %v349
    %654 = vadd.xlane.f32.xlu0 %v653
    %v655 = vpop.xlane.xlu0 %654
    %v656 = vadd.f32 %v350, %v351
    %v657 = vadd.f32 %v656, %v352
    %v658 = vadd.f32 %v657, %v353
    %659 = vadd.xlane.f32.xlu0 %v658
    %v660 = vpop.xlane.xlu0 %659
    %v661 = vadd.f32 %v354, %v355
    %v662 = vadd.f32 %v661, %v356
    %v663 = vadd.f32 %v662, %v357
    %664 = vadd.xlane.f32.xlu0 %v663
    %v665 = vpop.xlane.xlu0 %664
    %v666 = vadd.f32 %v358, %v359
    %v667 = vadd.f32 %v666, %v360
    %v668 = vadd.f32 %v667, %v361
    %669 = vadd.xlane.f32.xlu0 %v668
    %v670 = vpop.xlane.xlu0 %669
    %v671 = vadd.f32 %v362, %v363
    %v672 = vadd.f32 %v671, %v364
    %v673 = vadd.f32 %v672, %v365
    %674 = vadd.xlane.f32.xlu0 %v673
    %v675 = vpop.xlane.xlu0 %674
    %v676 = vadd.f32 %v366, %v367
    %v677 = vadd.f32 %v676, %v368
    %v678 = vadd.f32 %v677, %v369
    %679 = vadd.xlane.f32.xlu0 %v678
    %v680 = vpop.xlane.xlu0 %679
    %v681 = vadd.f32 %v370, %v371
    %v682 = vadd.f32 %v681, %v372
    %v683 = vadd.f32 %v682, %v373
    %684 = vadd.xlane.f32.xlu0 %v683
    %v685 = vpop.xlane.xlu0 %684
    %v686 = vadd.f32 %v374, %v375
    %v687 = vadd.f32 %v686, %v376
    %v688 = vadd.f32 %v687, %v377
    %689 = vadd.xlane.f32.xlu0 %v688
    %v690 = vpop.xlane.xlu0 %689
    %v691 = vadd.f32 %v378, %v379
    %v692 = vadd.f32 %v691, %v380
    %v693 = vadd.f32 %v692, %v381
    %694 = vadd.xlane.f32.xlu0 %v693
    %v695 = vpop.xlane.xlu0 %694
    %v696 = vadd.f32 %v382, %v383
    %v697 = vadd.f32 %v696, %v384
    %v698 = vadd.f32 %v697, %v385
    %699 = vadd.xlane.f32.xlu0 %v698
    %v700 = vpop.xlane.xlu0 %699
    %v701 = vadd.f32 %v386, %v387
    %v702 = vadd.f32 %v701, %v388
    %v703 = vadd.f32 %v702, %v389
    %704 = vadd.xlane.f32.xlu0 %v703
    %v705 = vpop.xlane.xlu0 %704
    %v706 = vadd.f32 %v390, %v391
    %v707 = vadd.f32 %v706, %v392
    %v708 = vadd.f32 %v707, %v393
    %709 = vadd.xlane.f32.xlu0 %v708
    %v710 = vpop.xlane.xlu0 %709
    %v711 = vadd.f32 %v394, %v395
    %v712 = vadd.f32 %v711, %v396
    %v713 = vadd.f32 %v712, %v397
    %714 = vadd.xlane.f32.xlu0 %v713
    %v715 = vpop.xlane.xlu0 %714
    %v716 = vadd.f32 %v398, %v399
    %v717 = vadd.f32 %v716, %v400
    %v718 = vadd.f32 %v717, %v401
    %719 = vadd.xlane.f32.xlu0 %v718
    %v720 = vpop.xlane.xlu0 %719
    %v721 = vadd.f32 %v402, %v403
    %v722 = vadd.f32 %v721, %v404
    %v723 = vadd.f32 %v722, %v405
    %724 = vadd.xlane.f32.xlu0 %v723
    %v725 = vpop.xlane.xlu0 %724
    %vm726 = vcmp.gt.f32.partialorder %v410, 0.0
    %vm727 = vcmp.gt.f32.partialorder %v415, 0.0
    %vm728 = vcmp.gt.f32.partialorder %v420, 0.0
    %vm729 = vcmp.gt.f32.partialorder %v425, 0.0
    %vm730 = vcmp.gt.f32.partialorder %v430, 0.0
    %vm731 = vcmp.gt.f32.partialorder %v435, 0.0
    %vm732 = vcmp.gt.f32.partialorder %v440, 0.0
    %vm733 = vcmp.gt.f32.partialorder %v445, 0.0
    %vm734 = vcmp.gt.f32.partialorder %v450, 0.0
    %vm735 = vcmp.gt.f32.partialorder %v455, 0.0
    %vm736 = vcmp.gt.f32.partialorder %v460, 0.0
    %vm737 = vcmp.gt.f32.partialorder %v465, 0.0
    %vm738 = vcmp.gt.f32.partialorder %v470, 0.0
    %vm739 = vcmp.gt.f32.partialorder %v475, 0.0
    %vm740 = vcmp.gt.f32.partialorder %v480, 0.0
    %vm741 = vcmp.gt.f32.partialorder %v485, 0.0
    %vm742 = vcmp.gt.f32.partialorder %v490, 0.0
    %vm743 = vcmp.gt.f32.partialorder %v495, 0.0
    %vm744 = vcmp.gt.f32.partialorder %v500, 0.0
    %vm745 = vcmp.gt.f32.partialorder %v505, 0.0
    %vm746 = vcmp.gt.f32.partialorder %v510, 0.0
    %vm747 = vcmp.gt.f32.partialorder %v515, 0.0
    %vm748 = vcmp.gt.f32.partialorder %v520, 0.0
    %vm749 = vcmp.gt.f32.partialorder %v525, 0.0
    %vm750 = vcmp.gt.f32.partialorder %v530, 0.0
    %vm751 = vcmp.gt.f32.partialorder %v535, 0.0
    %vm752 = vcmp.gt.f32.partialorder %v540, 0.0
    %vm753 = vcmp.gt.f32.partialorder %v545, 0.0
    %vm754 = vcmp.gt.f32.partialorder %v550, 0.0
    %vm755 = vcmp.gt.f32.partialorder %v555, 0.0
    %vm756 = vcmp.gt.f32.partialorder %v560, 0.0
    %vm757 = vcmp.gt.f32.partialorder %v565, 0.0
    %vm758 = vcmp.gt.f32.partialorder %v570, 0.0
    %vm759 = vcmp.gt.f32.partialorder %v575, 0.0
    %vm760 = vcmp.gt.f32.partialorder %v580, 0.0
    %vm761 = vcmp.gt.f32.partialorder %v585, 0.0
    %vm762 = vcmp.gt.f32.partialorder %v590, 0.0
    %vm763 = vcmp.gt.f32.partialorder %v595, 0.0
    %vm764 = vcmp.gt.f32.partialorder %v600, 0.0
    %vm765 = vcmp.gt.f32.partialorder %v605, 0.0
    %vm766 = vcmp.gt.f32.partialorder %v610, 0.0
    %vm767 = vcmp.gt.f32.partialorder %v615, 0.0
    %vm768 = vcmp.gt.f32.partialorder %v620, 0.0
    %vm769 = vcmp.gt.f32.partialorder %v625, 0.0
    %vm770 = vcmp.gt.f32.partialorder %v630, 0.0
    %vm771 = vcmp.gt.f32.partialorder %v635, 0.0
    %vm772 = vcmp.gt.f32.partialorder %v640, 0.0
    %vm773 = vcmp.gt.f32.partialorder %v645, 0.0
    %vm774 = vcmp.gt.f32.partialorder %v650, 0.0
    %vm775 = vcmp.gt.f32.partialorder %v655, 0.0
    %vm776 = vcmp.gt.f32.partialorder %v660, 0.0
    %vm777 = vcmp.gt.f32.partialorder %v665, 0.0
    %vm778 = vcmp.gt.f32.partialorder %v670, 0.0
    %vm779 = vcmp.gt.f32.partialorder %v675, 0.0
    %vm780 = vcmp.gt.f32.partialorder %v680, 0.0
    %vm781 = vcmp.gt.f32.partialorder %v685, 0.0
    %vm782 = vcmp.gt.f32.partialorder %v690, 0.0
    %vm783 = vcmp.gt.f32.partialorder %v695, 0.0
    %vm784 = vcmp.gt.f32.partialorder %v700, 0.0
    %vm785 = vcmp.gt.f32.partialorder %v705, 0.0
    %vm786 = vcmp.gt.f32.partialorder %v710, 0.0
    %vm787 = vcmp.gt.f32.partialorder %v715, 0.0
    %vm788 = vcmp.gt.f32.partialorder %v720, 0.0
    %vm789 = vcmp.gt.f32.partialorder %v725, 0.0
    %v790 = vmax.f32 %v410, 1e-12
    %v791 = vmax.f32 %v415, 1e-12
    %v792 = vmax.f32 %v420, 1e-12
    %v793 = vmax.f32 %v425, 1e-12
    %v794 = vmax.f32 %v430, 1e-12
    %v795 = vmax.f32 %v435, 1e-12
    %v796 = vmax.f32 %v440, 1e-12
    %v797 = vmax.f32 %v445, 1e-12
    %v798 = vmax.f32 %v450, 1e-12
    %v799 = vmax.f32 %v455, 1e-12
    %v800 = vmax.f32 %v460, 1e-12
    %v801 = vmax.f32 %v465, 1e-12
    %v802 = vmax.f32 %v470, 1e-12
    %v803 = vmax.f32 %v475, 1e-12
    %v804 = vmax.f32 %v480, 1e-12
    %v805 = vmax.f32 %v485, 1e-12
    %v806 = vmax.f32 %v490, 1e-12
    %v807 = vmax.f32 %v495, 1e-12
    %v808 = vmax.f32 %v500, 1e-12
    %v809 = vmax.f32 %v505, 1e-12
    %v810 = vmax.f32 %v510, 1e-12
    %v811 = vmax.f32 %v515, 1e-12
    %v812 = vmax.f32 %v520, 1e-12
    %v813 = vmax.f32 %v525, 1e-12
    %v814 = vmax.f32 %v530, 1e-12
    %v815 = vmax.f32 %v535, 1e-12
    %v816 = vmax.f32 %v540, 1e-12
    %v817 = vmax.f32 %v545, 1e-12
    %v818 = vmax.f32 %v550, 1e-12
    %v819 = vmax.f32 %v555, 1e-12
    %v820 = vmax.f32 %v560, 1e-12
    %v821 = vmax.f32 %v565, 1e-12
    %v822 = vmax.f32 %v570, 1e-12
    %v823 = vmax.f32 %v575, 1e-12
    %v824 = vmax.f32 %v580, 1e-12
    %v825 = vmax.f32 %v585, 1e-12
    %v826 = vmax.f32 %v590, 1e-12
    %v827 = vmax.f32 %v595, 1e-12
    %v828 = vmax.f32 %v600, 1e-12
    %v829 = vmax.f32 %v605, 1e-12
    %v830 = vmax.f32 %v610, 1e-12
    %v831 = vmax.f32 %v615, 1e-12
    %v832 = vmax.f32 %v620, 1e-12
    %v833 = vmax.f32 %v625, 1e-12
    %v834 = vmax.f32 %v630, 1e-12
    %v835 = vmax.f32 %v635, 1e-12
    %v836 = vmax.f32 %v640, 1e-12
    %v837 = vmax.f32 %v645, 1e-12
    %v838 = vmax.f32 %v650, 1e-12
    %v839 = vmax.f32 %v655, 1e-12
    %v840 = vmax.f32 %v660, 1e-12
    %v841 = vmax.f32 %v665, 1e-12
    %v842 = vmax.f32 %v670, 1e-12
    %v843 = vmax.f32 %v675, 1e-12
    %v844 = vmax.f32 %v680, 1e-12
    %v845 = vmax.f32 %v685, 1e-12
    %v846 = vmax.f32 %v690, 1e-12
    %v847 = vmax.f32 %v695, 1e-12
    %v848 = vmax.f32 %v700, 1e-12
    %v849 = vmax.f32 %v705, 1e-12
    %v850 = vmax.f32 %v710, 1e-12
    %v851 = vmax.f32 %v715, 1e-12
    %v852 = vmax.f32 %v720, 1e-12
    %v853 = vmax.f32 %v725, 1e-12
    %v854 = vrsqrt.pop %v790
    %v855 = vrsqrt.pop %v791
    %v856 = vrsqrt.pop %v792
    %v857 = vrsqrt.pop %v793
    %v858 = vrsqrt.pop %v794
    %v859 = vrsqrt.pop %v795
    %v860 = vrsqrt.pop %v796
    %v861 = vrsqrt.pop %v797
    %v862 = vrsqrt.pop %v798
    %v863 = vrsqrt.pop %v799
    %v864 = vrsqrt.pop %v800
    %v865 = vrsqrt.pop %v801
    %v866 = vrsqrt.pop %v802
    %v867 = vrsqrt.pop %v803
    %v868 = vrsqrt.pop %v804
    %v869 = vrsqrt.pop %v805
    %v870 = vrsqrt.pop %v806
    %v871 = vrsqrt.pop %v807
    %v872 = vrsqrt.pop %v808
    %v873 = vrsqrt.pop %v809
    %v874 = vrsqrt.pop %v810
    %v875 = vrsqrt.pop %v811
    %v876 = vrsqrt.pop %v812
    %v877 = vrsqrt.pop %v813
    %v878 = vrsqrt.pop %v814
    %v879 = vrsqrt.pop %v815
    %v880 = vrsqrt.pop %v816
    %v881 = vrsqrt.pop %v817
    %v882 = vrsqrt.pop %v818
    %v883 = vrsqrt.pop %v819
    %v884 = vrsqrt.pop %v820
    %v885 = vrsqrt.pop %v821
    %v886 = vrsqrt.pop %v822
    %v887 = vrsqrt.pop %v823
    %v888 = vrsqrt.pop %v824
    %v889 = vrsqrt.pop %v825
    %v890 = vrsqrt.pop %v826
    %v891 = vrsqrt.pop %v827
    %v892 = vrsqrt.pop %v828
    %v893 = vrsqrt.pop %v829
    %v894 = vrsqrt.pop %v830
    %v895 = vrsqrt.pop %v831
    %v896 = vrsqrt.pop %v832
    %v897 = vrsqrt.pop %v833
    %v898 = vrsqrt.pop %v834
    %v899 = vrsqrt.pop %v835
    %v900 = vrsqrt.pop %v836
    %v901 = vrsqrt.pop %v837
    %v902 = vrsqrt.pop %v838
    %v903 = vrsqrt.pop %v839
    %v904 = vrsqrt.pop %v840
    %v905 = vrsqrt.pop %v841
    %v906 = vrsqrt.pop %v842
    %v907 = vrsqrt.pop %v843
    %v908 = vrsqrt.pop %v844
    %v909 = vrsqrt.pop %v845
    %v910 = vrsqrt.pop %v846
    %v911 = vrsqrt.pop %v847
    %v912 = vrsqrt.pop %v848
    %v913 = vrsqrt.pop %v849
    %v914 = vrsqrt.pop %v850
    %v915 = vrsqrt.pop %v851
    %v916 = vrsqrt.pop %v852
    %v917 = vrsqrt.pop %v853
    %v918 = vsel %vm726, %v854, 0.0
    %v919 = vsel %vm727, %v855, 0.0
    %v920 = vsel %vm728, %v856, 0.0
    %v921 = vsel %vm729, %v857, 0.0
    %v922 = vsel %vm730, %v858, 0.0
    %v923 = vsel %vm731, %v859, 0.0
    %v924 = vsel %vm732, %v860, 0.0
    %v925 = vsel %vm733, %v861, 0.0
    %v926 = vsel %vm734, %v862, 0.0
    %v927 = vsel %vm735, %v863, 0.0
    %v928 = vsel %vm736, %v864, 0.0
    %v929 = vsel %vm737, %v865, 0.0
    %v930 = vsel %vm738, %v866, 0.0
    %v931 = vsel %vm739, %v867, 0.0
    %v932 = vsel %vm740, %v868, 0.0
    %v933 = vsel %vm741, %v869, 0.0
    %v934 = vsel %vm742, %v870, 0.0
    %v935 = vsel %vm743, %v871, 0.0
    %v936 = vsel %vm744, %v872, 0.0
    %v937 = vsel %vm745, %v873, 0.0
    %v938 = vsel %vm746, %v874, 0.0
    %v939 = vsel %vm747, %v875, 0.0
    %v940 = vsel %vm748, %v876, 0.0
    %v941 = vsel %vm749, %v877, 0.0
    %v942 = vsel %vm750, %v878, 0.0
    %v943 = vsel %vm751, %v879, 0.0
    %v944 = vsel %vm752, %v880, 0.0
    %v945 = vsel %vm753, %v881, 0.0
    %v946 = vsel %vm754, %v882, 0.0
    %v947 = vsel %vm755, %v883, 0.0
    %v948 = vsel %vm756, %v884, 0.0
    %v949 = vsel %vm757, %v885, 0.0
    %v950 = vsel %vm758, %v886, 0.0
    %v951 = vsel %vm759, %v887, 0.0
    %v952 = vsel %vm760, %v888, 0.0
    %v953 = vsel %vm761, %v889, 0.0
    %v954 = vsel %vm762, %v890, 0.0
    %v955 = vsel %vm763, %v891, 0.0
    %v956 = vsel %vm764, %v892, 0.0
    %v957 = vsel %vm765, %v893, 0.0
    %v958 = vsel %vm766, %v894, 0.0
    %v959 = vsel %vm767, %v895, 0.0
    %v960 = vsel %vm768, %v896, 0.0
    %v961 = vsel %vm769, %v897, 0.0
    %v962 = vsel %vm770, %v898, 0.0
    %v963 = vsel %vm771, %v899, 0.0
    %v964 = vsel %vm772, %v900, 0.0
    %v965 = vsel %vm773, %v901, 0.0
    %v966 = vsel %vm774, %v902, 0.0
    %v967 = vsel %vm775, %v903, 0.0
    %v968 = vsel %vm776, %v904, 0.0
    %v969 = vsel %vm777, %v905, 0.0
    %v970 = vsel %vm778, %v906, 0.0
    %v971 = vsel %vm779, %v907, 0.0
    %v972 = vsel %vm780, %v908, 0.0
    %v973 = vsel %vm781, %v909, 0.0
    %v974 = vsel %vm782, %v910, 0.0
    %v975 = vsel %vm783, %v911, 0.0
    %v976 = vsel %vm784, %v912, 0.0
    %v977 = vsel %vm785, %v913, 0.0
    %v978 = vsel %vm786, %v914, 0.0
    %v979 = vsel %vm787, %v915, 0.0
    %v980 = vsel %vm788, %v916, 0.0
    %v981 = vsel %vm789, %v917, 0.0
    %vm982 = vcmask 7168
    %983 = vst.msk [vmem:[%s1] sm:$0xff] %vm982, %v918
    %984 = vst.msk [vmem:[%s1 + $0x8] sm:$0xff] %vm982, %v919
    %985 = vst.msk [vmem:[%s1 + $0x10] sm:$0xff] %vm982, %v920
    %986 = vst.msk [vmem:[%s1 + $0x18] sm:$0xff] %vm982, %v921
    %987 = vst.msk [vmem:[%s1 + $0x20] sm:$0xff] %vm982, %v922
    %988 = vst.msk [vmem:[%s1 + $0x28] sm:$0xff] %vm982, %v923
    %989 = vst.msk [vmem:[%s1 + $0x30] sm:$0xff] %vm982, %v924
    %990 = vst.msk [vmem:[%s1 + $0x38] sm:$0xff] %vm982, %v925
    %991 = vst.msk [vmem:[%s1 + $0x40] sm:$0xff] %vm982, %v926
    %992 = vst.msk [vmem:[%s1 + $0x48] sm:$0xff] %vm982, %v927
    %993 = vst.msk [vmem:[%s1 + $0x50] sm:$0xff] %vm982, %v928
    %994 = vst.msk [vmem:[%s1 + $0x58] sm:$0xff] %vm982, %v929
    %995 = vst.msk [vmem:[%s1 + $0x60] sm:$0xff] %vm982, %v930
    %996 = vst.msk [vmem:[%s1 + $0x68] sm:$0xff] %vm982, %v931
    %997 = vst.msk [vmem:[%s1 + $0x70] sm:$0xff] %vm982, %v932
    %998 = vst.msk [vmem:[%s1 + $0x78] sm:$0xff] %vm982, %v933
    %999 = vst.msk [vmem:[%s1 + $0x80] sm:$0xff] %vm982, %v934
    %1000 = vst.msk [vmem:[%s1 + $0x88] sm:$0xff] %vm982, %v935
    %1001 = vst.msk [vmem:[%s1 + $0x90] sm:$0xff] %vm982, %v936
    %1002 = vst.msk [vmem:[%s1 + $0x98] sm:$0xff] %vm982, %v937
    %1003 = vst.msk [vmem:[%s1 + $0xa0] sm:$0xff] %vm982, %v938
    %1004 = vst.msk [vmem:[%s1 + $0xa8] sm:$0xff] %vm982, %v939
    %1005 = vst.msk [vmem:[%s1 + $0xb0] sm:$0xff] %vm982, %v940
    %1006 = vst.msk [vmem:[%s1 + $0xb8] sm:$0xff] %vm982, %v941
    %1007 = vst.msk [vmem:[%s1 + $0xc0] sm:$0xff] %vm982, %v942
    %1008 = vst.msk [vmem:[%s1 + $0xc8] sm:$0xff] %vm982, %v943
    %1009 = vst.msk [vmem:[%s1 + $0xd0] sm:$0xff] %vm982, %v944
    %1010 = vst.msk [vmem:[%s1 + $0xd8] sm:$0xff] %vm982, %v945
    %1011 = vst.msk [vmem:[%s1 + $0xe0] sm:$0xff] %vm982, %v946
    %1012 = vst.msk [vmem:[%s1 + $0xe8] sm:$0xff] %vm982, %v947
    %1013 = vst.msk [vmem:[%s1 + $0xf0] sm:$0xff] %vm982, %v948
    %1014 = vst.msk [vmem:[%s1 + $0xf8] sm:$0xff] %vm982, %v949
    %1015 = vst.msk [vmem:[%s1 + $0x100] sm:$0xff] %vm982, %v950
    %1016 = vst.msk [vmem:[%s1 + $0x108] sm:$0xff] %vm982, %v951
    %1017 = vst.msk [vmem:[%s1 + $0x110] sm:$0xff] %vm982, %v952
    %1018 = vst.msk [vmem:[%s1 + $0x118] sm:$0xff] %vm982, %v953
    %1019 = vst.msk [vmem:[%s1 + $0x120] sm:$0xff] %vm982, %v954
    %1020 = vst.msk [vmem:[%s1 + $0x128] sm:$0xff] %vm982, %v955
    %1021 = vst.msk [vmem:[%s1 + $0x130] sm:$0xff] %vm982, %v956
    %1022 = vst.msk [vmem:[%s1 + $0x138] sm:$0xff] %vm982, %v957
    %1023 = vst.msk [vmem:[%s1 + $0x140] sm:$0xff] %vm982, %v958
    %1024 = vst.msk [vmem:[%s1 + $0x148] sm:$0xff] %vm982, %v959
    %1025 = vst.msk [vmem:[%s1 + $0x150] sm:$0xff] %vm982, %v960
    %1026 = vst.msk [vmem:[%s1 + $0x158] sm:$0xff] %vm982, %v961
    %1027 = vst.msk [vmem:[%s1 + $0x160] sm:$0xff] %vm982, %v962
    %1028 = vst.msk [vmem:[%s1 + $0x168] sm:$0xff] %vm982, %v963
    %1029 = vst.msk [vmem:[%s1 + $0x170] sm:$0xff] %vm982, %v964
    %1030 = vst.msk [vmem:[%s1 + $0x178] sm:$0xff] %vm982, %v965
    %1031 = vst.msk [vmem:[%s1 + $0x180] sm:$0xff] %vm982, %v966
    %1032 = vst.msk [vmem:[%s1 + $0x188] sm:$0xff] %vm982, %v967
    %1033 = vst.msk [vmem:[%s1 + $0x190] sm:$0xff] %vm982, %v968
    %1034 = vst.msk [vmem:[%s1 + $0x198] sm:$0xff] %vm982, %v969
    %1035 = vst.msk [vmem:[%s1 + $0x1a0] sm:$0xff] %vm982, %v970
    %1036 = vst.msk [vmem:[%s1 + $0x1a8] sm:$0xff] %vm982, %v971
    %1037 = vst.msk [vmem:[%s1 + $0x1b0] sm:$0xff] %vm982, %v972
    %1038 = vst.msk [vmem:[%s1 + $0x1b8] sm:$0xff] %vm982, %v973
    %1039 = vst.msk [vmem:[%s1 + $0x1c0] sm:$0xff] %vm982, %v974
    %1040 = vst.msk [vmem:[%s1 + $0x1c8] sm:$0xff] %vm982, %v975
    %1041 = vst.msk [vmem:[%s1 + $0x1d0] sm:$0xff] %vm982, %v976
    %1042 = vst.msk [vmem:[%s1 + $0x1d8] sm:$0xff] %vm982, %v977
    %1043 = vst.msk [vmem:[%s1 + $0x1e0] sm:$0xff] %vm982, %v978
    %1044 = vst.msk [vmem:[%s1 + $0x1e8] sm:$0xff] %vm982, %v979
    %1045 = vst.msk [vmem:[%s1 + $0x1f0] sm:$0xff] %vm982, %v980
    %1046 = vst.msk [vmem:[%s1 + $0x1f8] sm:$0xff] %vm982, %v981
    // Predicated region
    $region10: #{tpu_custom_call.1} parent=1 // pred_check
      _
    $region11: #{tpu_custom_call.1} parent=1 // pred_check_branch
      %1048 = sbr.rel (0) target = $region13
    $region12: #{tpu_custom_call.1} parent=1 // pred_region
      _
    $region13: #{tpu_custom_call.1} parent=1 // pred_fallthru
      _
    // Predicated region
    $region14: #{tpu_custom_call.1} parent=1 // pred_check
      _
    $region15: #{tpu_custom_call.1} parent=1 // pred_check_branch
      %1050 = sbr.rel (0) target = $region17
    $region16: #{tpu_custom_call.1} parent=1 // pred_region
      _
    $region17: #{tpu_custom_call.1} parent=1 // pred_fallthru
      _
    %1051 = vsyncpa [#allocation3], 1

</llo_original>
